<compile_context>
chip_gen: v6e
topology: v6e:2x2x1
jax: 0.10.0
libtpu: 0.0.40
codegen_flags: <defaults>
</compile_context>

<pallas_src>
import functools

import jax
import jax.numpy as jnp
from jax.experimental import pallas as pl
from jax.experimental.pallas import tpu as pltpu


# ----------------------------- Pallas kernel -------------------------------


def _critic_kernel(
    obs_ref, act_ref,
    wt_ref,      # [repr_dim, F]              trunk weight
    tvec_ref,    # [3, F]                     rows: trunk bias, LN gamma, LN beta
    w1_ref,      # [F + A, 2H]                fused first layer (h rows, then action rows)
    qvec_ref,    # [3, 2H]                    rows: b1_fused, b2_fused, b3_fused (padded)
    w2_ref,      # [2H, 2H]                   block-diagonal fused second layer
    w3_ref,      # [2H, 2]                    stacked block-diag final projection
    out_ref,     # [B, 2]                     col 0 = q1, col 1 = q2
    *, feature_dim,
):
    F = feature_dim

    obs = obs_ref[...].astype(jnp.float32)
    act = act_ref[...].astype(jnp.float32)

    # ---- trunk: Linear -> LayerNorm -> Tanh ----
    tvec = tvec_ref[...]
    bt, ln_g, ln_b = tvec[0:1, :], tvec[1:2, :], tvec[2:3, :]

    t = jnp.dot(obs, wt_ref[...], preferred_element_type=jnp.float32) + bt
    mean = jnp.mean(t, axis=-1, keepdims=True)
    mean2 = jnp.mean(t * t, axis=-1, keepdims=True)
    var = jnp.maximum(mean2 - mean * mean, 0.0)        # one-pass variance
    h = jnp.tanh((t - mean) * jax.lax.rsqrt(var + 1e-5) * ln_g + ln_b)

    # ---- fused Q heads: Linear -> ReLU -> Linear -> ReLU -> Linear(->2) ----
    w1 = w1_ref[...]
    qvec = qvec_ref[...]
    b1 = qvec[0:1, :]
    b2 = qvec[1:2, :]
    b3 = qvec[2:3, :2]

    # cat([h, act]) @ W1  ==  h @ W1[:F] + act @ W1[F:]
    x = (jnp.dot(h, w1[:F, :], preferred_element_type=jnp.float32)
         + jnp.dot(act, w1[F:, :], preferred_element_type=jnp.float32)
         + b1)
    x = jnp.maximum(x, 0.0)
    x = jnp.dot(x, w2_ref[...], preferred_element_type=jnp.float32) + b2
    x = jnp.maximum(x, 0.0)
    out_ref[...] = jnp.dot(x, w3_ref[...], preferred_element_type=jnp.float32) + b3


# ------------------------------- wrapper ------------------------------------


@jax.jit
def critic_forward(obs, action, packed):
    """packed = (wt, trunk_vecs, w1_fused, qvecs, w2_blockdiag, w3_stacked)."""
    wt = packed[0]
    feature_dim = wt.shape[1]
    B = obs.shape[0]

    vmem = pl.BlockSpec(memory_space=pltpu.MemorySpace.VMEM)
    kernel = functools.partial(_critic_kernel, feature_dim=feature_dim)

    out = pl.pallas_call(
        kernel,
        out_shape=jax.ShapeDtypeStruct((B, 2), jnp.float32),
        in_specs=[vmem] * (2 + len(packed)),
        out_specs=vmem,
    )(obs, action, *packed)

    # Single lane-packed output; split into the module's (q1, q2) here.
    return out[:, 0:1], out[:, 1:2]


# --------------------------- parameter handling ------------------------------


def init_params(key, repr_dim, action_dim, feature_dim, hidden_dim):
    """Per-head (unfused) params, PyTorch-equivalent; weights [in, out], biases [1, out]."""
    ks = jax.random.split(key, 4)
    s = 0.1

    def w(k, shape):
        return (s * jax.random.normal(k, shape)).astype(jnp.float32)

    # trunk
    wt = w(ks[0], (repr_dim, feature_dim))
    bt = w(ks[1], (1, feature_dim))
    ln_g = jnp.ones((1, feature_dim), jnp.float32)
    ln_b = jnp.zeros((1, feature_dim), jnp.float32)

    def q_params(kbase):
        kk = jax.random.split(kbase, 6)
        w1 = w(kk[0], (feature_dim + action_dim, hidden_dim))
        b1 = w(kk[1], (1, hidden_dim))
        w2 = w(kk[2], (hidden_dim, hidden_dim))
        b2 = w(kk[3], (1, hidden_dim))
        w3 = w(kk[4], (hidden_dim, 1))
        b3 = w(kk[5], (1, 1))
        return (w1[:feature_dim], w1[feature_dim:], b1, w2, b2, w3, b3)

    return (wt, bt, ln_g, ln_b) + q_params(ks[2]) + q_params(ks[3])


def pack_params(params):
    """Fuse the two Q heads and pack everything into 6 arrays (6 DMAs)."""
    (wt, bt, ln_g, ln_b,
     q1w1h, q1w1a, q1b1, q1w2, q1b2, q1w3, q1b3,
     q2w1h, q2w1a, q2b1, q2w2, q2b2, q2w3, q2b3) = params

    H = q1w2.shape[0]
    zH = jnp.zeros((H, H), jnp.float32)
    z1 = jnp.zeros((H, 1), jnp.float32)

    trunk_vecs = jnp.concatenate([bt, ln_g, ln_b], axis=0)                # [3, F]

    w1 = jnp.concatenate(
        [jnp.concatenate([q1w1h, q2w1h], axis=1),                        # [F, 2H]
         jnp.concatenate([q1w1a, q2w1a], axis=1)], axis=0)               # [A, 2H]

    w2 = jnp.concatenate(
        [jnp.concatenate([q1w2, zH], axis=1),
         jnp.concatenate([zH, q2w2], axis=1)], axis=0)                   # [2H, 2H]

    w3 = jnp.concatenate(
        [jnp.concatenate([q1w3, z1], axis=1),
         jnp.concatenate([z1, q2w3], axis=1)], axis=0)                   # [2H, 2]

    b1 = jnp.concatenate([q1b1, q2b1], axis=1)                           # [1, 2H]
    b2 = jnp.concatenate([q1b2, q2b2], axis=1)                           # [1, 2H]
    b3 = jnp.concatenate([q1b3, q2b3], axis=1)                           # [1, 2]
    b3_pad = jnp.pad(b3, ((0, 0), (0, 2 * H - 2)))
    qvecs = jnp.concatenate([b1, b2, b3_pad], axis=0)                    # [3, 2H]

    return (wt, trunk_vecs, w1, qvecs, w2, w3)


# ------------------------------ reference ------------------------------------


def critic_reference(obs, action, params):
    (wt, bt, ln_g, ln_b,
     q1w1h, q1w1a, q1b1, q1w2, q1b2, q1w3, q1b3,
     q2w1h, q2w1a, q2b1, q2w2, q2b2, q2w3, q2b3) = params

    t = obs @ wt + bt
    mean = jnp.mean(t, axis=-1, keepdims=True)
    var = jnp.mean((t - mean) ** 2, axis=-1, keepdims=True)
    h = jnp.tanh((t - mean) / jnp.sqrt(var + 1e-5) * ln_g + ln_b)
    ha = jnp.concatenate([h, action], axis=-1)

    def q(w1h, w1a, b1, w2, b2, w3, b3):
        w1 = jnp.concatenate([w1h, w1a], axis=0)
        x = jnp.maximum(ha @ w1 + b1, 0.0)
        x = jnp.maximum(x @ w2 + b2, 0.0)
        return x @ w3 + b3

    return (q(q1w1h, q1w1a, q1b1, q1w2, q1b2, q1w3, q1b3),
            q(q2w1h, q2w1a, q2b1, q2w2, q2b2, q2w3, q2b3))


# --------------------------------- main --------------------------------------


if __name__ == "__main__":
    B = 8
    repr_dim = 64
    action_dim = 6
    feature_dim = 32
    hidden_dim = 32

    key = jax.random.PRNGKey(0)
    k_obs, k_act, k_par = jax.random.split(key, 3)

    obs = jax.random.normal(k_obs, (B, repr_dim), dtype=jnp.float32)
    action = jax.random.normal(k_act, (B, action_dim), dtype=jnp.float32)
    params = init_params(k_par, repr_dim, action_dim, feature_dim, hidden_dim)
    packed = pack_params(params)

    q1, q2 = critic_forward(obs, action, packed)
    jax.block_until_ready((q1, q2))

    q1_ref, q2_ref = critic_reference(obs, action, params)
    assert q1.shape == (B, 1) and q2.shape == (B, 1)
    assert jnp.allclose(q1, q1_ref, atol=1e-4, rtol=1e-4)
    assert jnp.allclose(q2, q2_ref, atol=1e-4, rtol=1e-4)

    print("KERNEL_OK")
</pallas_src>

<mosaic_0001>
module attributes {stable_mosaic.version = 11 : i64} {
  func.func @_critic_kernel(%arg0: memref<8x64xf32, #tpu.memory_space<vmem>>, %arg1: memref<8x6xf32, #tpu.memory_space<vmem>>, %arg2: memref<64x32xf32, #tpu.memory_space<vmem>>, %arg3: memref<3x32xf32, #tpu.memory_space<vmem>>, %arg4: memref<38x64xf32, #tpu.memory_space<vmem>>, %arg5: memref<3x64xf32, #tpu.memory_space<vmem>>, %arg6: memref<64x64xf32, #tpu.memory_space<vmem>>, %arg7: memref<64x2xf32, #tpu.memory_space<vmem>>, %arg8: memref<8x2xf32, #tpu.memory_space<vmem>>) attributes {dimension_semantics = [], scalar_prefetch = 0 : i64, scratch_operands = 0 : i64, tpu.core_type = #tpu.core_type<tc>} {
    %c0 = arith.constant 0 : index
    %c0_0 = arith.constant 0 : index
    %0 = vector.load %arg0[%c0, %c0_0] : memref<8x64xf32, #tpu.memory_space<vmem>>, vector<8x64xf32>
    %c0_1 = arith.constant 0 : index
    %c0_2 = arith.constant 0 : index
    %1 = vector.load %arg1[%c0_1, %c0_2] : memref<8x6xf32, #tpu.memory_space<vmem>>, vector<8x6xf32>
    %c0_3 = arith.constant 0 : index
    %c0_4 = arith.constant 0 : index
    %2 = vector.load %arg3[%c0_3, %c0_4] : memref<3x32xf32, #tpu.memory_space<vmem>>, vector<3x32xf32>
    %3 = vector.extract_strided_slice %2 {offsets = [0, 0], sizes = [1, 32], strides = [1, 1]} : vector<3x32xf32> to vector<1x32xf32>
    %4 = vector.extract_strided_slice %2 {offsets = [1, 0], sizes = [1, 32], strides = [1, 1]} : vector<3x32xf32> to vector<1x32xf32>
    %5 = vector.extract_strided_slice %2 {offsets = [2, 0], sizes = [1, 32], strides = [1, 1]} : vector<3x32xf32> to vector<1x32xf32>
    %c0_5 = arith.constant 0 : index
    %c0_6 = arith.constant 0 : index
    %6 = vector.load %arg2[%c0_5, %c0_6] : memref<64x32xf32, #tpu.memory_space<vmem>>, vector<64x32xf32>
    %cst = arith.constant dense<0.000000e+00> : vector<8x32xf32>
    %7 = tpu.matmul %0, %6, %cst {dimension_numbers = #tpu.dot_dimension_numbers<[1], [0], [0], [1], [0, 0, 1, 1], [], []>} : vector<8x64xf32>, vector<64x32xf32>, vector<8x32xf32> -> vector<8x32xf32>
    %8 = vector.broadcast %3 : vector<1x32xf32> to vector<8x32xf32>
    %9 = arith.addf %7, %8 : vector<8x32xf32>
    %cst_7 = arith.constant dense<0.000000e+00> : vector<8xf32>
    %10 = vector.multi_reduction <add>, %9, %cst_7 [1] : vector<8x32xf32> to vector<8xf32>
    %11 = vector.shape_cast %10 : vector<8xf32> to vector<8x1xf32>
    %cst_8 = arith.constant 3.200000e+01 : f32
    %12 = vector.broadcast %cst_8 : f32 to vector<8x1xf32>
    %13 = arith.divf %11, %12 : vector<8x1xf32>
    %14 = arith.mulf %9, %9 : vector<8x32xf32>
    %cst_9 = arith.constant dense<0.000000e+00> : vector<8xf32>
    %15 = vector.multi_reduction <add>, %14, %cst_9 [1] : vector<8x32xf32> to vector<8xf32>
    %16 = vector.shape_cast %15 : vector<8xf32> to vector<8x1xf32>
    %cst_10 = arith.constant 3.200000e+01 : f32
    %17 = vector.broadcast %cst_10 : f32 to vector<8x1xf32>
    %18 = arith.divf %16, %17 : vector<8x1xf32>
    %19 = arith.mulf %13, %13 : vector<8x1xf32>
    %20 = arith.subf %18, %19 : vector<8x1xf32>
    %cst_11 = arith.constant 0.000000e+00 : f32
    %21 = vector.broadcast %cst_11 : f32 to vector<8x1xf32>
    %22 = arith.maximumf %20, %21 : vector<8x1xf32>
    %23 = vector.broadcast %13 : vector<8x1xf32> to vector<8x32xf32>
    %24 = arith.subf %9, %23 : vector<8x32xf32>
    %cst_12 = arith.constant 9.99999974E-6 : f32
    %25 = vector.broadcast %cst_12 : f32 to vector<8x1xf32>
    %26 = arith.addf %22, %25 : vector<8x1xf32>
    %27 = math.rsqrt %26 : vector<8x1xf32>
    %28 = vector.broadcast %27 : vector<8x1xf32> to vector<8x32xf32>
    %29 = arith.mulf %24, %28 : vector<8x32xf32>
    %30 = vector.broadcast %4 : vector<1x32xf32> to vector<8x32xf32>
    %31 = arith.mulf %29, %30 : vector<8x32xf32>
    %32 = vector.broadcast %5 : vector<1x32xf32> to vector<8x32xf32>
    %33 = arith.addf %31, %32 : vector<8x32xf32>
    %34 = math.tanh %33 : vector<8x32xf32>
    %c0_13 = arith.constant 0 : index
    %c0_14 = arith.constant 0 : index
    %35 = vector.load %arg4[%c0_13, %c0_14] : memref<38x64xf32, #tpu.memory_space<vmem>>, vector<38x64xf32>
    %c0_15 = arith.constant 0 : index
    %c0_16 = arith.constant 0 : index
    %36 = vector.load %arg5[%c0_15, %c0_16] : memref<3x64xf32, #tpu.memory_space<vmem>>, vector<3x64xf32>
    %37 = vector.extract_strided_slice %36 {offsets = [0, 0], sizes = [1, 64], strides = [1, 1]} : vector<3x64xf32> to vector<1x64xf32>
    %38 = vector.extract_strided_slice %36 {offsets = [1, 0], sizes = [1, 64], strides = [1, 1]} : vector<3x64xf32> to vector<1x64xf32>
    %39 = vector.extract_strided_slice %36 {offsets = [2, 0], sizes = [1, 2], strides = [1, 1]} : vector<3x64xf32> to vector<1x2xf32>
    %40 = vector.extract_strided_slice %35 {offsets = [0, 0], sizes = [32, 64], strides = [1, 1]} : vector<38x64xf32> to vector<32x64xf32>
    %cst_17 = arith.constant dense<0.000000e+00> : vector<8x64xf32>
    %41 = tpu.matmul %34, %40, %cst_17 {dimension_numbers = #tpu.dot_dimension_numbers<[1], [0], [0], [1], [0, 0, 1, 1], [], []>} : vector<8x32xf32>, vector<32x64xf32>, vector<8x64xf32> -> vector<8x64xf32>
    %42 = vector.extract_strided_slice %35 {offsets = [32, 0], sizes = [6, 64], strides = [1, 1]} : vector<38x64xf32> to vector<6x64xf32>
    %cst_18 = arith.constant dense<0.000000e+00> : vector<8x64xf32>
    %43 = tpu.matmul %1, %42, %cst_18 {dimension_numbers = #tpu.dot_dimension_numbers<[1], [0], [0], [1], [0, 0, 1, 1], [], []>} : vector<8x6xf32>, vector<6x64xf32>, vector<8x64xf32> -> vector<8x64xf32>
    %44 = arith.addf %41, %43 : vector<8x64xf32>
    %45 = vector.broadcast %37 : vector<1x64xf32> to vector<8x64xf32>
    %46 = arith.addf %44, %45 : vector<8x64xf32>
    %cst_19 = arith.constant 0.000000e+00 : f32
    %47 = vector.broadcast %cst_19 : f32 to vector<8x64xf32>
    %48 = arith.maximumf %46, %47 : vector<8x64xf32>
    %c0_20 = arith.constant 0 : index
    %c0_21 = arith.constant 0 : index
    %49 = vector.load %arg6[%c0_20, %c0_21] : memref<64x64xf32, #tpu.memory_space<vmem>>, vector<64x64xf32>
    %cst_22 = arith.constant dense<0.000000e+00> : vector<8x64xf32>
    %50 = tpu.matmul %48, %49, %cst_22 {dimension_numbers = #tpu.dot_dimension_numbers<[1], [0], [0], [1], [0, 0, 1, 1], [], []>} : vector<8x64xf32>, vector<64x64xf32>, vector<8x64xf32> -> vector<8x64xf32>
    %51 = vector.broadcast %38 : vector<1x64xf32> to vector<8x64xf32>
    %52 = arith.addf %50, %51 : vector<8x64xf32>
    %cst_23 = arith.constant 0.000000e+00 : f32
    %53 = vector.broadcast %cst_23 : f32 to vector<8x64xf32>
    %54 = arith.maximumf %52, %53 : vector<8x64xf32>
    %c0_24 = arith.constant 0 : index
    %c0_25 = arith.constant 0 : index
    %55 = vector.load %arg7[%c0_24, %c0_25] : memref<64x2xf32, #tpu.memory_space<vmem>>, vector<64x2xf32>
    %cst_26 = arith.constant dense<0.000000e+00> : vector<8x2xf32>
    %56 = tpu.matmul %54, %55, %cst_26 {dimension_numbers = #tpu.dot_dimension_numbers<[1], [0], [0], [1], [0, 0, 1, 1], [], []>} : vector<8x64xf32>, vector<64x2xf32>, vector<8x2xf32> -> vector<8x2xf32>
    %57 = vector.broadcast %39 : vector<1x2xf32> to vector<8x2xf32>
    %58 = arith.addf %56, %57 : vector<8x2xf32>
    %c0_27 = arith.constant 0 : index
    %c0_28 = arith.constant 0 : index
    %59 = vector.load %arg8[%c0_27, %c0_28] : memref<8x2xf32, #tpu.memory_space<vmem>>, vector<8x2xf32>
    tpu.vector_store %arg8[%c0_27, %c0_28], %58 {strides = array<i32>} : memref<8x2xf32, #tpu.memory_space<vmem>>, vector<8x2xf32>,
    return
  }
}

</mosaic_0001>

<llo_original>
// kernel: critic_forward.1
$region0: #{critic_forward.1}
  #allocation0 [shape = 'u32[]', space=smem, size = 0x4, offset = 0x4, fixed_abs, tag = 'smem constant byte address 0x4 - core index']
  #allocation1 [shape = 'u32[144,128]{1,0:T(1,128)}', space=vmem, size = 0x12000, scoped, tag = 'internal scratch']
  %s0 = inlined_call_operand.vmem [shape: f32[8,64], index: 0, kind: input, shape index: {}]
  %s1 = inlined_call_operand.vmem [shape: f32[8,6], index: 1, kind: input, shape index: {}]
  %s2 = inlined_call_operand.vmem [shape: f32[64,32], index: 2, kind: input, shape index: {}]
  %s3 = inlined_call_operand.vmem [shape: f32[3,32], index: 3, kind: input, shape index: {}]
  %s4 = inlined_call_operand.vmem [shape: f32[38,64], index: 4, kind: input, shape index: {}]
  %s5 = inlined_call_operand.vmem [shape: f32[3,64], index: 5, kind: input, shape index: {}]
  %s6 = inlined_call_operand.vmem [shape: f32[64,64], index: 6, kind: input, shape index: {}]
  %s7 = inlined_call_operand.vmem [shape: f32[64,2], index: 7, kind: input, shape index: {}]
  %s8 = inlined_call_operand.vmem [shape: f32[8,2], index: 8, kind: output, shape index: {}]
  %s9 = sld [smem:[#allocation0]]
  $region42: #{critic_forward.1} parent=0
    _
  %s11 = ssub.s32 1, %s9
  %s12 = scalar_select 0, %s11, %s9
  // Predicated region
  $region2: #{critic_forward.1} parent=0 // pred_check
    _
  $region3: #{critic_forward.1} parent=0 // pred_check_branch
    %14 = sbr.rel (0) target = $region5
  $region4: #{critic_forward.1} parent=0 // pred_region
    _
  $region5: #{critic_forward.1} parent=0 // pred_fallthru
    _
  // Predicated region
  $region6: #{critic_forward.1} parent=0 // pred_check
    _
  $region7: #{critic_forward.1} parent=0 // pred_check_branch
    %16 = sbr.rel (0) target = $region9
  $region8: #{critic_forward.1} parent=0 // pred_region
    _
  $region9: #{critic_forward.1} parent=0 // pred_fallthru
    _
  // Predicated region
  $region10: #{critic_forward.1} parent=0 // pred_check
    _
  $region11: #{critic_forward.1} parent=0 // pred_check_branch
    %18 = sbr.rel (0) target = $region13
  $region12: #{critic_forward.1} parent=0 // pred_region
    _
  $region13: #{critic_forward.1} parent=0 // pred_fallthru
    _
  // Predicated region
  $region14: #{critic_forward.1} parent=0 // pred_check
    _
  $region15: #{critic_forward.1} parent=0 // pred_check_branch
    %20 = sbr.rel (0) target = $region17
  $region16: #{critic_forward.1} parent=0 // pred_region
    _
  $region17: #{critic_forward.1} parent=0 // pred_fallthru
    _
  // Predicated region
  $region18: #{critic_forward.1} parent=0 // pred_check
    _
  $region19: #{critic_forward.1} parent=0 // pred_check_branch
    %22 = sbr.rel (0) target = $region21
  $region20: #{critic_forward.1} parent=0 // pred_region
    _
  $region21: #{critic_forward.1} parent=0 // pred_fallthru
    _
  // Predicated region
  $region22: #{critic_forward.1} parent=0 // pred_check
    _
  $region23: #{critic_forward.1} parent=0 // pred_check_branch
    %24 = sbr.rel (0) target = $region25
  $region24: #{critic_forward.1} parent=0 // pred_region
    _
  $region25: #{critic_forward.1} parent=0 // pred_fallthru
    _
  // Predicated region
  $region26: #{critic_forward.1} parent=0 // pred_check
    _
  $region27: #{critic_forward.1} parent=0 // pred_check_branch
    %26 = sbr.rel (0) target = $region29
  $region28: #{critic_forward.1} parent=0 // pred_region
    _
  $region29: #{critic_forward.1} parent=0 // pred_fallthru
    _
  // Predicated region
  $region30: #{critic_forward.1} parent=0 // pred_check
    _
  $region31: #{critic_forward.1} parent=0 // pred_check_branch
    %28 = sbr.rel (0) target = $region33
  $region32: #{critic_forward.1} parent=0 // pred_region
    _
  $region33: #{critic_forward.1} parent=0 // pred_fallthru
    _
  %v29 = vld [vmem:[%s0] sm:$0xff]
  %v30 = vld [vmem:[%s1] sm:$0xff]
  %v31 = vld [vmem:[%s3] sm:$0x7]
  %v32 = vld [vmem:[%s2] sm:$0xff]
  %v33 = vld [vmem:[%s2 + $0x8] sm:$0xff]
  %v34 = vld [vmem:[%s2 + $0x10] sm:$0xff]
  %v35 = vld [vmem:[%s2 + $0x18] sm:$0xff]
  %v36 = vld [vmem:[%s2 + $0x20] sm:$0xff]
  %v37 = vld [vmem:[%s2 + $0x28] sm:$0xff]
  %v38 = vld [vmem:[%s2 + $0x30] sm:$0xff]
  %v39 = vld [vmem:[%s2 + $0x38] sm:$0xff]
  %v40 = vlaneseq
  %v41 = vshrl.u32 %v40, 7
  %v42 = vsub.s32 0, %v41
  %v43 = vrot.slane %v31, %v42
  %vm44 = vcmask 523264
  %v46 = vsel %vm44, %v29, 0
  %48 = vmatprep.subr.mxu0 0.0
  %49 = vmatpush1.msra.mxu0 0.0
  %50 = vmatprep.subr.mxu0 0.0
  %51 = vmatpush1.msra.mxu0 0.0
  %52 = vmatprep.subr.mxu0 0.0
  %53 = vmatpush1.msra.mxu0 0.0
  %54 = vmatprep.subr.mxu0 0.0
  %55 = vmatpush1.msra.mxu0 0.0
  %56 = vmatprep.subr.mxu0 0.0
  %57 = vmatpush1.msra.mxu0 0.0
  %58 = vmatprep.subr.mxu0 0.0
  %59 = vmatpush1.msra.mxu0 0.0
  %60 = vmatprep.subr.mxu0 0.0
  %61 = vmatpush1.msra.mxu0 0.0
  %62 = vmatprep.subr.mxu0 0.0
  %63 = vmatpush1.msra.mxu0 0.0
  %64 = vmatprep.subr.mxu0 0.0
  %65 = vmatpush1.msra.mxu0 %v39
  %66 = vmatprep.subr.mxu0 0.0
  %67 = vmatpush1.msra.mxu0 %v38
  %68 = vmatprep.subr.mxu0 0.0
  %69 = vmatpush1.msra.mxu0 %v37
  %70 = vmatprep.subr.mxu0 0.0
  %71 = vmatpush1.msra.mxu0 %v36
  %72 = vmatprep.subr.mxu0 0.0
  %73 = vmatpush1.msra.mxu0 %v35
  %74 = vmatprep.subr.mxu0 0.0
  %75 = vmatpush1.msra.mxu0 %v34
  %76 = vmatprep.subr.mxu0 0.0
  %77 = vmatpush1.msra.mxu0 %v33
  %78 = vmatprep.subr.mxu0 0.0
  %79 = vmatpush1.msra.mxu0 %v32
  %80 = vmatprep.subr.mxu0 0.0
  %81 = vmatpush2.msra.mxu0 0.0
  %82 = vmatprep.subr.mxu0 0.0
  %83 = vmatpush2.msra.mxu0 0.0
  %84 = vmatprep.subr.mxu0 0.0
  %85 = vmatpush2.msra.mxu0 0.0
  %86 = vmatprep.subr.mxu0 0.0
  %87 = vmatpush2.msra.mxu0 0.0
  %88 = vmatprep.subr.mxu0 0.0
  %89 = vmatpush2.msra.mxu0 0.0
  %90 = vmatprep.subr.mxu0 0.0
  %91 = vmatpush2.msra.mxu0 0.0
  %92 = vmatprep.subr.mxu0 0.0
  %93 = vmatpush2.msra.mxu0 0.0
  %94 = vmatprep.subr.mxu0 0.0
  %95 = vmatpush2.msra.mxu0 0.0
  %96 = vmatprep.subr.mxu0 0.0
  %97 = vmatpush2.msra.mxu0 0.0
  %98 = vmatprep.subr.mxu0 0.0
  %99 = vmatpush2.msra.mxu0 0.0
  %100 = vmatprep.subr.mxu0 0.0
  %101 = vmatpush2.msra.mxu0 0.0
  %102 = vmatprep.subr.mxu0 0.0
  %103 = vmatpush2.msra.mxu0 0.0
  %104 = vmatprep.subr.mxu0 0.0
  %105 = vmatpush2.msra.mxu0 0.0
  %106 = vmatprep.subr.mxu0 0.0
  %107 = vmatpush2.msra.mxu0 0.0
  %108 = vmatprep.subr.mxu0 0.0
  %109 = vmatpush2.msra.mxu0 0.0
  %110 = vmatprep.subr.mxu0 0.0
  %111 = vmatpush2.msra.mxu0 0.0
  %112 = vmatprep.mubr.f32.mxu0 0.0
  %113 = vmatmul.mubr.f32.gmra.mxu0 %v46
  %v114 = vpop.f32.mrf.mxu0
  %v115 = vadd.f32 %v43, %v114
  %v116 = vpop.f32.mrf.mxu0
  %117 = vdwg.mxu0
  %vm118 = vcmask 261120
  %v119 = vsel %vm118, %v115, 0.0
  %120 = vadd.xlane.f32.xlu0 %v119
  %v121 = vpop.xlane.xlu0 %120
  %v122 = vrcp.pop 32.0
  %v123 = vmul.f32 %v121, %v122
  %v124 = vmul.f32 %v115, %v115
  %v125 = vsel %vm118, %v124, 0.0
  %126 = vadd.xlane.f32.xlu0 %v125
  %v127 = vpop.xlane.xlu0 %126
  %v128 = vmul.f32 %v127, %v122
  %v129 = vmul.f32 %v123, %v123
  %v130 = vsub.f32 %v128, %v129
  %v131 = vmax.f32 %v130, 0.0
  %v132 = vsub.f32 %v115, %v123
  %v133 = vadd.f32 %v131, 1e-05
  %v134 = vrsqrt.pop %v133
  %v135 = vmul.f32 %v132, %v134
  %v136 = vlaneseq
  %v137 = vshrl.u32 %v136, 7
  %v138 = vsub.s32 1, %v137
  %v139 = vrot.slane %v31, %v138
  %v140 = vmul.f32 %v135, %v139
  %v141 = vlaneseq
  %v142 = vshrl.u32 %v141, 7
  %v143 = vsub.s32 2, %v142
  %v144 = vrot.slane %v31, %v143
  %v145 = vadd.f32 %v140, %v144
  %v146 = vtanh.pop %v145
  %v147 = vld [vmem:[%s4] sm:$0xff]
  %v148 = vld [vmem:[%s4 + $0x8] sm:$0xff]
  %v149 = vld [vmem:[%s4 + $0x10] sm:$0xff]
  %v150 = vld [vmem:[%s4 + $0x18] sm:$0xff]
  %v151 = vld [vmem:[%s4 + $0x20] sm:$0x3f]
  %v152 = vld [vmem:[%s5] sm:$0x7]
  %vm153 = vcmask 48128
  %v155 = vsel %vm153, %v30, 0
  %vm157 = vcmask 1045504
  %v159 = vsel %vm157, %v151, 0
  %161 = vmatprep.subr.mxu0 0.0
  %162 = vmatpush1.msra.mxu0 0.0
  %163 = vmatprep.subr.mxu0 0.0
  %164 = vmatpush1.msra.mxu0 0.0
  %165 = vmatprep.subr.mxu0 0.0
  %166 = vmatpush1.msra.mxu0 0.0
  %167 = vmatprep.subr.mxu0 0.0
  %168 = vmatpush1.msra.mxu0 0.0
  %169 = vmatprep.subr.mxu0 0.0
  %170 = vmatpush1.msra.mxu0 0.0
  %171 = vmatprep.subr.mxu0 0.0
  %172 = vmatpush1.msra.mxu0 0.0
  %173 = vmatprep.subr.mxu0 0.0
  %174 = vmatpush1.msra.mxu0 0.0
  %175 = vmatprep.subr.mxu0 0.0
  %176 = vmatpush1.msra.mxu0 0.0
  %177 = vmatprep.subr.mxu0 0.0
  %178 = vmatpush1.msra.mxu0 0.0
  %179 = vmatprep.subr.mxu0 0.0
  %180 = vmatpush1.msra.mxu0 0.0
  %181 = vmatprep.subr.mxu0 0.0
  %182 = vmatpush1.msra.mxu0 0.0
  %183 = vmatprep.subr.mxu0 0.0
  %184 = vmatpush1.msra.mxu0 0.0
  %185 = vmatprep.subr.mxu0 0.0
  %186 = vmatpush1.msra.mxu0 0.0
  %187 = vmatprep.subr.mxu0 0.0
  %188 = vmatpush1.msra.mxu0 0.0
  %189 = vmatprep.subr.mxu0 0.0
  %190 = vmatpush1.msra.mxu0 0.0
  %191 = vmatprep.subr.mxu0 0.0
  %192 = vmatpush1.msra.mxu0 %v159
  %193 = vmatprep.subr.mxu0 0.0
  %194 = vmatpush2.msra.mxu0 0.0
  %195 = vmatprep.subr.mxu0 0.0
  %196 = vmatpush2.msra.mxu0 0.0
  %197 = vmatprep.subr.mxu0 0.0
  %198 = vmatpush2.msra.mxu0 0.0
  %199 = vmatprep.subr.mxu0 0.0
  %200 = vmatpush2.msra.mxu0 0.0
  %201 = vmatprep.subr.mxu0 0.0
  %202 = vmatpush2.msra.mxu0 0.0
  %203 = vmatprep.subr.mxu0 0.0
  %204 = vmatpush2.msra.mxu0 0.0
  %205 = vmatprep.subr.mxu0 0.0
  %206 = vmatpush2.msra.mxu0 0.0
  %207 = vmatprep.subr.mxu0 0.0
  %208 = vmatpush2.msra.mxu0 0.0
  %209 = vmatprep.subr.mxu0 0.0
  %210 = vmatpush2.msra.mxu0 0.0
  %211 = vmatprep.subr.mxu0 0.0
  %212 = vmatpush2.msra.mxu0 0.0
  %213 = vmatprep.subr.mxu0 0.0
  %214 = vmatpush2.msra.mxu0 0.0
  %215 = vmatprep.subr.mxu0 0.0
  %216 = vmatpush2.msra.mxu0 0.0
  %217 = vmatprep.subr.mxu0 0.0
  %218 = vmatpush2.msra.mxu0 0.0
  %219 = vmatprep.subr.mxu0 0.0
  %220 = vmatpush2.msra.mxu0 0.0
  %221 = vmatprep.subr.mxu0 0.0
  %222 = vmatpush2.msra.mxu0 0.0
  %223 = vmatprep.subr.mxu0 0.0
  %224 = vmatpush2.msra.mxu0 0.0
  %225 = vmatprep.mubr.f32.mxu0 0.0
  %226 = vmatmul.mubr.f32.gmra.mxu0 %v155
  %v227 = vpop.f32.mrf.mxu0
  %v228 = vadd.f32 0.0, %v227
  %v229 = vpop.f32.mrf.mxu0
  %230 = vdwg.mxu0
  %v232 = vsel %vm118, %v146, 0
  %234 = vmatprep.subr.mxu0 0.0
  %235 = vmatpush1.msra.mxu0 0.0
  %236 = vmatprep.subr.mxu0 0.0
  %237 = vmatpush1.msra.mxu0 0.0
  %238 = vmatprep.subr.mxu0 0.0
  %239 = vmatpush1.msra.mxu0 0.0
  %240 = vmatprep.subr.mxu0 0.0
  %241 = vmatpush1.msra.mxu0 0.0
  %242 = vmatprep.subr.mxu0 0.0
  %243 = vmatpush1.msra.mxu0 0.0
  %244 = vmatprep.subr.mxu0 0.0
  %245 = vmatpush1.msra.mxu0 0.0
  %246 = vmatprep.subr.mxu0 0.0
  %247 = vmatpush1.msra.mxu0 0.0
  %248 = vmatprep.subr.mxu0 0.0
  %249 = vmatpush1.msra.mxu0 0.0
  %250 = vmatprep.subr.mxu0 0.0
  %251 = vmatpush1.msra.mxu0 0.0
  %252 = vmatprep.subr.mxu0 0.0
  %253 = vmatpush1.msra.mxu0 0.0
  %254 = vmatprep.subr.mxu0 0.0
  %255 = vmatpush1.msra.mxu0 0.0
  %256 = vmatprep.subr.mxu0 0.0
  %257 = vmatpush1.msra.mxu0 0.0
  %258 = vmatprep.subr.mxu0 0.0
  %259 = vmatpush1.msra.mxu0 %v150
  %260 = vmatprep.subr.mxu0 0.0
  %261 = vmatpush1.msra.mxu0 %v149
  %262 = vmatprep.subr.mxu0 0.0
  %263 = vmatpush1.msra.mxu0 %v148
  %264 = vmatprep.subr.mxu0 0.0
  %265 = vmatpush1.msra.mxu0 %v147
  %266 = vmatprep.subr.mxu0 0.0
  %267 = vmatpush2.msra.mxu0 0.0
  %268 = vmatprep.subr.mxu0 0.0
  %269 = vmatpush2.msra.mxu0 0.0
  %270 = vmatprep.subr.mxu0 0.0
  %271 = vmatpush2.msra.mxu0 0.0
  %272 = vmatprep.subr.mxu0 0.0
  %273 = vmatpush2.msra.mxu0 0.0
  %274 = vmatprep.subr.mxu0 0.0
  %275 = vmatpush2.msra.mxu0 0.0
  %276 = vmatprep.subr.mxu0 0.0
  %277 = vmatpush2.msra.mxu0 0.0
  %278 = vmatprep.subr.mxu0 0.0
  %279 = vmatpush2.msra.mxu0 0.0
  %280 = vmatprep.subr.mxu0 0.0
  %281 = vmatpush2.msra.mxu0 0.0
  %282 = vmatprep.subr.mxu0 0.0
  %283 = vmatpush2.msra.mxu0 0.0
  %284 = vmatprep.subr.mxu0 0.0
  %285 = vmatpush2.msra.mxu0 0.0
  %286 = vmatprep.subr.mxu0 0.0
  %287 = vmatpush2.msra.mxu0 0.0
  %288 = vmatprep.subr.mxu0 0.0
  %289 = vmatpush2.msra.mxu0 0.0
  %290 = vmatprep.subr.mxu0 0.0
  %291 = vmatpush2.msra.mxu0 0.0
  %292 = vmatprep.subr.mxu0 0.0
  %293 = vmatpush2.msra.mxu0 0.0
  %294 = vmatprep.subr.mxu0 0.0
  %295 = vmatpush2.msra.mxu0 0.0
  %296 = vmatprep.subr.mxu0 0.0
  %297 = vmatpush2.msra.mxu0 0.0
  %298 = vmatprep.mubr.f32.mxu0 0.0
  %299 = vmatmul.mubr.f32.gmra.mxu0 %v232
  %v300 = vpop.f32.mrf.mxu0
  %v301 = vadd.f32 %v228, %v300
  %v302 = vpop.f32.mrf.mxu0
  %303 = vdwg.mxu0
  %v304 = vlaneseq
  %v305 = vshrl.u32 %v304, 7
  %v306 = vsub.s32 0, %v305
  %v307 = vrot.slane %v152, %v306
  %v308 = vadd.f32 %v301, %v307
  %v309 = vmax.f32 %v308, 0.0
  %v310 = vld [vmem:[%s6] sm:$0xff]
  %v311 = vld [vmem:[%s6 + $0x8] sm:$0xff]
  %v312 = vld [vmem:[%s6 + $0x10] sm:$0xff]
  %v313 = vld [vmem:[%s6 + $0x18] sm:$0xff]
  %v314 = vld [vmem:[%s6 + $0x20] sm:$0xff]
  %v315 = vld [vmem:[%s6 + $0x28] sm:$0xff]
  %v316 = vld [vmem:[%s6 + $0x30] sm:$0xff]
  %v317 = vld [vmem:[%s6 + $0x38] sm:$0xff]
  %v318 = vlaneseq
  %v319 = vshrl.u32 %v318, 7
  %v320 = vsub.s32 1, %v319
  %v321 = vrot.slane %v152, %v320
  %v323 = vsel %vm44, %v309, 0
  %325 = vmatprep.subr.mxu0 0.0
  %326 = vmatpush1.msra.mxu0 0.0
  %327 = vmatprep.subr.mxu0 0.0
  %328 = vmatpush1.msra.mxu0 0.0
  %329 = vmatprep.subr.mxu0 0.0
  %330 = vmatpush1.msra.mxu0 0.0
  %331 = vmatprep.subr.mxu0 0.0
  %332 = vmatpush1.msra.mxu0 0.0
  %333 = vmatprep.subr.mxu0 0.0
  %334 = vmatpush1.msra.mxu0 0.0
  %335 = vmatprep.subr.mxu0 0.0
  %336 = vmatpush1.msra.mxu0 0.0
  %337 = vmatprep.subr.mxu0 0.0
  %338 = vmatpush1.msra.mxu0 0.0
  %339 = vmatprep.subr.mxu0 0.0
  %340 = vmatpush1.msra.mxu0 0.0
  %341 = vmatprep.subr.mxu0 0.0
  %342 = vmatpush1.msra.mxu0 %v317
  %343 = vmatprep.subr.mxu0 0.0
  %344 = vmatpush1.msra.mxu0 %v316
  %345 = vmatprep.subr.mxu0 0.0
  %346 = vmatpush1.msra.mxu0 %v315
  %347 = vmatprep.subr.mxu0 0.0
  %348 = vmatpush1.msra.mxu0 %v314
  %349 = vmatprep.subr.mxu0 0.0
  %350 = vmatpush1.msra.mxu0 %v313
  %351 = vmatprep.subr.mxu0 0.0
  %352 = vmatpush1.msra.mxu0 %v312
  %353 = vmatprep.subr.mxu0 0.0
  %354 = vmatpush1.msra.mxu0 %v311
  %355 = vmatprep.subr.mxu0 0.0
  %356 = vmatpush1.msra.mxu0 %v310
  %357 = vmatprep.subr.mxu0 0.0
  %358 = vmatpush2.msra.mxu0 0.0
  %359 = vmatprep.subr.mxu0 0.0
  %360 = vmatpush2.msra.mxu0 0.0
  %361 = vmatprep.subr.mxu0 0.0
  %362 = vmatpush2.msra.mxu0 0.0
  %363 = vmatprep.subr.mxu0 0.0
  %364 = vmatpush2.msra.mxu0 0.0
  %365 = vmatprep.subr.mxu0 0.0
  %366 = vmatpush2.msra.mxu0 0.0
  %367 = vmatprep.subr.mxu0 0.0
  %368 = vmatpush2.msra.mxu0 0.0
  %369 = vmatprep.subr.mxu0 0.0
  %370 = vmatpush2.msra.mxu0 0.0
  %371 = vmatprep.subr.mxu0 0.0
  %372 = vmatpush2.msra.mxu0 0.0
  %373 = vmatprep.subr.mxu0 0.0
  %374 = vmatpush2.msra.mxu0 0.0
  %375 = vmatprep.subr.mxu0 0.0
  %376 = vmatpush2.msra.mxu0 0.0
  %377 = vmatprep.subr.mxu0 0.0
  %378 = vmatpush2.msra.mxu0 0.0
  %379 = vmatprep.subr.mxu0 0.0
  %380 = vmatpush2.msra.mxu0 0.0
  %381 = vmatprep.subr.mxu0 0.0
  %382 = vmatpush2.msra.mxu0 0.0
  %383 = vmatprep.subr.mxu0 0.0
  %384 = vmatpush2.msra.mxu0 0.0
  %385 = vmatprep.subr.mxu0 0.0
  %386 = vmatpush2.msra.mxu0 0.0
  %387 = vmatprep.subr.mxu0 0.0
  %388 = vmatpush2.msra.mxu0 0.0
  %389 = vmatprep.mubr.f32.mxu0 0.0
  %390 = vmatmul.mubr.f32.gmra.mxu0 %v323
  %v391 = vpop.f32.mrf.mxu0
  %v392 = vadd.f32 %v321, %v391
  %v393 = vpop.f32.mrf.mxu0
  %394 = vdwg.mxu0
  %v395 = vmax.f32 %v392, 0.0
  %v396 = vld [vmem:[%s7] sm:$0xff]
  %v397 = vld [vmem:[%s7 + $0x8] sm:$0xff]
  %v398 = vld [vmem:[%s7 + $0x10] sm:$0xff]
  %v399 = vld [vmem:[%s7 + $0x18] sm:$0xff]
  %v400 = vld [vmem:[%s7 + $0x20] sm:$0xff]
  %v401 = vld [vmem:[%s7 + $0x28] sm:$0xff]
  %v402 = vld [vmem:[%s7 + $0x30] sm:$0xff]
  %v403 = vld [vmem:[%s7 + $0x38] sm:$0xff]
  %v404 = vlaneseq
  %v405 = vshrl.u32 %v404, 7
  %v406 = vsub.s32 2, %v405
  %v407 = vrot.slane %v152, %v406
  %v409 = vsel %vm44, %v395, 0
  %411 = vmatprep.subr.mxu0 0.0
  %412 = vmatpush1.msra.mxu0 0.0
  %413 = vmatprep.subr.mxu0 0.0
  %414 = vmatpush1.msra.mxu0 0.0
  %415 = vmatprep.subr.mxu0 0.0
  %416 = vmatpush1.msra.mxu0 0.0
  %417 = vmatprep.subr.mxu0 0.0
  %418 = vmatpush1.msra.mxu0 0.0
  %419 = vmatprep.subr.mxu0 0.0
  %420 = vmatpush1.msra.mxu0 0.0
  %421 = vmatprep.subr.mxu0 0.0
  %422 = vmatpush1.msra.mxu0 0.0
  %423 = vmatprep.subr.mxu0 0.0
  %424 = vmatpush1.msra.mxu0 0.0
  %425 = vmatprep.subr.mxu0 0.0
  %426 = vmatpush1.msra.mxu0 0.0
  %427 = vmatprep.subr.mxu0 0.0
  %428 = vmatpush1.msra.mxu0 %v403
  %429 = vmatprep.subr.mxu0 0.0
  %430 = vmatpush1.msra.mxu0 %v402
  %431 = vmatprep.subr.mxu0 0.0
  %432 = vmatpush1.msra.mxu0 %v401
  %433 = vmatprep.subr.mxu0 0.0
  %434 = vmatpush1.msra.mxu0 %v400
  %435 = vmatprep.subr.mxu0 0.0
  %436 = vmatpush1.msra.mxu0 %v399
  %437 = vmatprep.subr.mxu0 0.0
  %438 = vmatpush1.msra.mxu0 %v398
  %439 = vmatprep.subr.mxu0 0.0
  %440 = vmatpush1.msra.mxu0 %v397
  %441 = vmatprep.subr.mxu0 0.0
  %442 = vmatpush1.msra.mxu0 %v396
  %443 = vmatprep.subr.mxu0 0.0
  %444 = vmatpush2.msra.mxu0 0.0
  %445 = vmatprep.subr.mxu0 0.0
  %446 = vmatpush2.msra.mxu0 0.0
  %447 = vmatprep.subr.mxu0 0.0
  %448 = vmatpush2.msra.mxu0 0.0
  %449 = vmatprep.subr.mxu0 0.0
  %450 = vmatpush2.msra.mxu0 0.0
  %451 = vmatprep.subr.mxu0 0.0
  %452 = vmatpush2.msra.mxu0 0.0
  %453 = vmatprep.subr.mxu0 0.0
  %454 = vmatpush2.msra.mxu0 0.0
  %455 = vmatprep.subr.mxu0 0.0
  %456 = vmatpush2.msra.mxu0 0.0
  %457 = vmatprep.subr.mxu0 0.0
  %458 = vmatpush2.msra.mxu0 0.0
  %459 = vmatprep.subr.mxu0 0.0
  %460 = vmatpush2.msra.mxu0 0.0
  %461 = vmatprep.subr.mxu0 0.0
  %462 = vmatpush2.msra.mxu0 0.0
  %463 = vmatprep.subr.mxu0 0.0
  %464 = vmatpush2.msra.mxu0 0.0
  %465 = vmatprep.subr.mxu0 0.0
  %466 = vmatpush2.msra.mxu0 0.0
  %467 = vmatprep.subr.mxu0 0.0
  %468 = vmatpush2.msra.mxu0 0.0
  %469 = vmatprep.subr.mxu0 0.0
  %470 = vmatpush2.msra.mxu0 0.0
  %471 = vmatprep.subr.mxu0 0.0
  %472 = vmatpush2.msra.mxu0 0.0
  %473 = vmatprep.subr.mxu0 0.0
  %474 = vmatpush2.msra.mxu0 0.0
  %475 = vmatprep.mubr.f32.mxu0 0.0
  %476 = vmatmul.mubr.f32.gmra.mxu0 %v409
  %v477 = vpop.f32.mrf.mxu0
  %v478 = vadd.f32 %v407, %v477
  %v479 = vpop.f32.mrf.mxu0
  %480 = vdwg.mxu0
  %vm481 = vcmask 15360
  %482 = vst.msk [vmem:[%s8] sm:$0xff] %vm481, %v478
  // Predicated region
  $region34: #{critic_forward.1} parent=0 // pred_check
    _
  $region35: #{critic_forward.1} parent=0 // pred_check_branch
    %484 = sbr.rel (0) target = $region37
  $region36: #{critic_forward.1} parent=0 // pred_region
    _
  $region37: #{critic_forward.1} parent=0 // pred_fallthru
    _
  // Predicated region
  $region38: #{critic_forward.1} parent=0 // pred_check
    _
  $region39: #{critic_forward.1} parent=0 // pred_check_branch
    %486 = sbr.rel (0) target = $region41
  $region40: #{critic_forward.1} parent=0 // pred_region
    _
  $region41: #{critic_forward.1} parent=0 // pred_fallthru
    _

</llo_original>
